<compile_context>
chip_gen: v6e
topology: v6e:2x2x1
jax: 0.10.0
libtpu: 0.0.40
codegen_flags: <defaults>
</compile_context>

<pallas_src>
import functools

import jax
import jax.numpy as jnp
import numpy as np
from jax.experimental import pallas as pl
from jax.experimental.pallas import tpu as pltpu


def _conv1d_glu_kernel(x_ref, halo_ref, w_ref, b_ref, o_ref, *, K, pad, T):
    """One (batch, time-tile) step, time on the lane axis.

    x_ref:    (1, C_in, tT)        centre time tile of x.
    halo_ref: (1, 1, C_in, 2*pad)  [left halo | right halo] columns, zeroed
                                   where they fall outside [0, T).
    w_ref:    (2*C_out, K*C_in)    w[o, k*C_in + c] = weight[o, c, k].
    b_ref:    (2*C_out, 1)         f32 bias.
    o_ref:    (1, C_out, tT)       output tile (lane-dense when tT % 128 == 0).
    """
    C_in, tT = x_ref.shape[1], x_ref.shape[2]
    C_out = o_ref.shape[1]

    center = x_ref[0]                                         # (C_in, tT)
    if T % tT != 0:
        # Partial last tile: zero garbage columns (t >= T) so the conv taps see
        # the same zero padding as PyTorch's Conv1d.  Static no-op when T % tT == 0.
        t_local = jax.lax.broadcasted_iota(jnp.int32, (1, tT), 1)
        valid = t_local < (T - pl.program_id(1) * tT)
        center = jnp.where(valid, center, jnp.zeros((), center.dtype))

    left = halo_ref[0, 0, :, :pad]                            # (C_in, pad)
    right = halo_ref[0, 0, :, pad:]                           # (C_in, pad)
    win = jnp.concatenate([left, center, right], axis=1)      # (C_in, tT + 2*pad)

    # im2col over the K taps -> one deep MXU contraction over K*C_in per tile.
    rhs = jnp.concatenate([win[:, k:k + tT] for k in range(K)], axis=0)
    acc = jnp.dot(w_ref[...], rhs, preferred_element_type=jnp.float32)
    acc = acc + b_ref[...]                                    # (2*C_out, tT), f32

    x1 = acc[:C_out, :]
    x2 = acc[C_out:, :]
    gated = x1 * jax.nn.sigmoid(x2)

    # Residual straight from the already-loaded centre tile (C_in == C_out).
    o_ref[0] = (center.astype(jnp.float32) + gated).astype(o_ref.dtype)


@functools.partial(jax.jit, static_argnames=("padding", "time_tile"))
def conv1d_glu(x, weight, bias, *, padding=2, time_tile=512):
    """Conv1dGLU forward.

    x:      (N, C_in, T) — PyTorch NCW layout (output returned in the same layout).
    weight: (2*C_out, C_in, K), bias: (2*C_out,)  — nn.Conv1d parameters.
    time_tile: requested time rows per grid step (snapped to a multiple of 128).
    """
    N, C_in, T = x.shape
    two_cout, C_w, K = weight.shape
    C_out = two_cout // 2
    pad = int(padding)
    if C_w != C_in or C_in != C_out:
        raise ValueError("Conv1dGLU residual requires in_channels == out_channels")
    if 2 * pad != K - 1:
        raise ValueError("padding must equal (kernel_size - 1) // 2 "
                         "(the module hardcodes padding=2, i.e. kernel_size=5)")
    if pad < 1:
        raise ValueError("kernel_size must be >= 3")

    # ---- time tiling: lane-dense tiles (multiples of 128) or the full extent --
    LANE = 128
    itemsize = jnp.dtype(x.dtype).itemsize

    def est_bytes(tt):  # per-step VMEM footprint estimate (double-buffered I/O)
        return ((2 * C_in * tt                         # centre tile  x2 buffers
                 + 2 * C_in * 2 * pad                  # halo tile    x2 buffers
                 + 2 * two_cout * K * C_in             # weights      x2 buffers
                 + 2 * two_cout                        # bias         x2 buffers
                 + 2 * C_out * tt                      # output tile  x2 buffers
                 + K * C_in * tt                       # im2col rhs
                 + C_in * (tt + 2 * pad)) * itemsize   # concatenated window
                + 3 * two_cout * tt * 4)               # f32 acc / epilogue temps

    try:
        vmem_cap = int(pltpu.get_tpu_info().vmem_capacity_bytes)
    except Exception:
        vmem_cap = 64 * 1024 * 1024                    # conservative (v7x) cap
    budget = (vmem_cap * 3) // 4

    if T <= LANE or int(time_tile) >= T:
        tT = T
    else:
        tT = max(LANE, (min(int(time_tile), T) // LANE) * LANE)
    while T > LANE and tT > LANE and est_bytes(tT) > budget:
        tT = max(LANE, ((tT // 2) // LANE) * LANE)     # auto-shrink to fit VMEM
    nT = pl.cdiv(T, tT)
    vmem_limit = int(min(max(2 * est_bytes(tT), 32 * 1024 * 1024), budget))

    # ---- tiny halo side array: (N, nT, C_in, 2*pad), zeroed outside [0, T) ----
    starts = np.arange(nT) * tT
    idx = np.concatenate(
        [starts[:, None] - pad + np.arange(pad)[None, :],   # left halo columns
         starts[:, None] + tT + np.arange(pad)[None, :]],   # right halo columns
        axis=1)                                              # (nT, 2*pad)
    in_range = jnp.asarray((idx >= 0) & (idx < T))
    idx_clipped = jnp.asarray(np.clip(idx, 0, T - 1).reshape(-1))
    halo = jnp.take(x, idx_clipped, axis=2).reshape(N, C_in, nT, 2 * pad)
    halo = jnp.where(in_range[None, None], halo, jnp.zeros((), x.dtype))
    halo = jnp.transpose(halo, (0, 2, 1, 3))                 # (N, nT, C_in, 2p)

    # ---- parameters in matmul layout ------------------------------------------
    w2 = jnp.transpose(weight, (0, 2, 1)).reshape(two_cout, K * C_in).astype(x.dtype)
    b2 = bias.reshape(two_cout, 1).astype(jnp.float32)

    kernel = functools.partial(_conv1d_glu_kernel, K=K, pad=pad, T=T)
    out = pl.pallas_call(
        kernel,
        out_shape=jax.ShapeDtypeStruct((N, C_out, T), x.dtype),
        grid_spec=pltpu.PrefetchScalarGridSpec(
            num_scalar_prefetch=0,
            grid=(N, nT),
            in_specs=[
                pl.BlockSpec((1, C_in, tT), lambda b, i: (b, 0, i)),
                pl.BlockSpec((1, 1, C_in, 2 * pad), lambda b, i: (b, i, 0, 0)),
                pl.BlockSpec((two_cout, K * C_in), lambda b, i: (0, 0)),
                pl.BlockSpec((two_cout, 1), lambda b, i: (0, 0)),
            ],
            out_specs=pl.BlockSpec((1, C_out, tT), lambda b, i: (b, 0, i)),
        ),
        compiler_params=pltpu.CompilerParams(
            dimension_semantics=("parallel", "parallel"),
            vmem_limit_bytes=vmem_limit,
        ),
    )(x, halo, w2, b2)
    return out


def _reference(x, weight, bias, padding=2):
    """Pure-JAX reference mirroring the PyTorch forward (dropout = identity)."""
    two_cout = weight.shape[0]
    C_out = two_cout // 2
    y = jax.lax.conv_general_dilated(
        x.astype(jnp.float32), weight.astype(jnp.float32),
        window_strides=(1,), padding=[(padding, padding)],
        dimension_numbers=("NCH", "OIH", "NCH"),
    ) + bias.astype(jnp.float32)[None, :, None]
    x1, x2 = y[:, :C_out, :], y[:, C_out:, :]
    return x.astype(jnp.float32) + x1 * jax.nn.sigmoid(x2)


if __name__ == "__main__":
    def run_case(key, N, C, T, K, time_tile):
        kx, kw, kb = jax.random.split(key, 3)
        x = jax.random.normal(kx, (N, C, T), dtype=jnp.float32)
        bound = 1.0 / np.sqrt(C * K)
        weight = jax.random.uniform(kw, (2 * C, C, K), jnp.float32, -bound, bound)
        bias = jax.random.uniform(kb, (2 * C,), jnp.float32, -bound, bound)
        pad = (K - 1) // 2
        out = jax.block_until_ready(
            conv1d_glu(x, weight, bias, padding=pad, time_tile=time_tile))
        ref = np.asarray(_reference(x, weight, bias, padding=pad))
        np.testing.assert_allclose(np.asarray(out), ref, rtol=2e-5, atol=2e-5)

    root = jax.random.PRNGKey(0)
    k1, k2, k3 = jax.random.split(root, 3)

    # 1) small module-like config (single full-extent time tile).
    run_case(k1, N=2, C=8, T=16, K=5, time_tile=512)
    # 2) multi-tile, lane-aligned time tiles.
    run_case(k2, N=2, C=16, T=256, K=5, time_tile=128)
    # 3) multi-tile with a ragged (partial) last time tile.
    run_case(k3, N=2, C=8, T=200, K=5, time_tile=128)

    print("KERNEL_OK")
</pallas_src>

<mosaic_0001>
module attributes {stable_mosaic.version = 11 : i64} {
  func.func @_conv1d_glu_kernel(%arg0: i32, %arg1: i32, %arg2: memref<1x8x16xf32, #tpu.memory_space<vmem>>, %arg3: memref<1x1x8x4xf32, #tpu.memory_space<vmem>>, %arg4: memref<16x40xf32, #tpu.memory_space<vmem>>, %arg5: memref<16x1xf32, #tpu.memory_space<vmem>>, %arg6: memref<1x8x16xf32, #tpu.memory_space<vmem>>) attributes {dimension_semantics = [#tpu.dimension_semantics<parallel>, #tpu.dimension_semantics<parallel>], iteration_bounds = array<i64: 2, 1>, scalar_prefetch = 0 : i64, scratch_operands = 0 : i64, tpu.core_type = #tpu.core_type<tc>, window_params = [{transform_indices = @transform_0, window_bounds = array<i64: 1, 8, 16>}, {transform_indices = @transform_1, window_bounds = array<i64: 1, 1, 8, 4>}, {pipeline_mode = #tpu.pipeline_mode<synchronous>, transform_indices = @transform_2, window_bounds = array<i64: 16, 40>}, {pipeline_mode = #tpu.pipeline_mode<synchronous>, transform_indices = @transform_3, window_bounds = array<i64: 16, 1>}, {transform_indices = @transform_4, window_bounds = array<i64: 1, 8, 16>}]} {
    %c0 = arith.constant 0 : index
    %c0_0 = arith.constant 0 : index
    %c0_1 = arith.constant 0 : index
    %0 = vector.load %arg2[%c0, %c0_0, %c0_1] : memref<1x8x16xf32, #tpu.memory_space<vmem>>, vector<1x8x16xf32>
    %1 = vector.shape_cast %0 : vector<1x8x16xf32> to vector<8x16xf32>
    %c0_2 = arith.constant 0 : index
    %c0_3 = arith.constant 0 : index
    %c0_4 = arith.constant 0 : index
    %c0_5 = arith.constant 0 : index
    %2 = vector.load %arg3[%c0_2, %c0_3, %c0_4, %c0_5] : memref<1x1x8x4xf32, #tpu.memory_space<vmem>>, vector<1x1x8x2xf32>
    %3 = vector.shape_cast %2 : vector<1x1x8x2xf32> to vector<8x2xf32>
    %c0_6 = arith.constant 0 : index
    %c0_7 = arith.constant 0 : index
    %c0_8 = arith.constant 0 : index
    %c2 = arith.constant 2 : index
    %4 = vector.load %arg3[%c0_6, %c0_7, %c0_8, %c2] : memref<1x1x8x4xf32, #tpu.memory_space<vmem>>, vector<1x1x8x2xf32>
    %5 = vector.shape_cast %4 : vector<1x1x8x2xf32> to vector<8x2xf32>
    %6 = tpu.concatenate %3, %1, %5 in 1 : vector<8x2xf32>, vector<8x16xf32>, vector<8x2xf32> -> vector<8x20xf32>
    %7 = vector.extract_strided_slice %6 {offsets = [0, 0], sizes = [8, 16], strides = [1, 1]} : vector<8x20xf32> to vector<8x16xf32>
    %8 = vector.extract_strided_slice %6 {offsets = [0, 1], sizes = [8, 16], strides = [1, 1]} : vector<8x20xf32> to vector<8x16xf32>
    %9 = vector.extract_strided_slice %6 {offsets = [0, 2], sizes = [8, 16], strides = [1, 1]} : vector<8x20xf32> to vector<8x16xf32>
    %10 = vector.extract_strided_slice %6 {offsets = [0, 3], sizes = [8, 16], strides = [1, 1]} : vector<8x20xf32> to vector<8x16xf32>
    %11 = vector.extract_strided_slice %6 {offsets = [0, 4], sizes = [8, 16], strides = [1, 1]} : vector<8x20xf32> to vector<8x16xf32>
    %12 = tpu.concatenate %7, %8, %9, %10, %11 in 0 : vector<8x16xf32>, vector<8x16xf32>, vector<8x16xf32>, vector<8x16xf32>, vector<8x16xf32> -> vector<40x16xf32>
    %c0_9 = arith.constant 0 : index
    %c0_10 = arith.constant 0 : index
    %13 = vector.load %arg4[%c0_9, %c0_10] : memref<16x40xf32, #tpu.memory_space<vmem>>, vector<16x40xf32>
    %cst = arith.constant dense<0.000000e+00> : vector<16x16xf32>
    %14 = tpu.matmul %13, %12, %cst {dimension_numbers = #tpu.dot_dimension_numbers<[1], [0], [0], [1], [0, 0, 1, 1], [], []>} : vector<16x40xf32>, vector<40x16xf32>, vector<16x16xf32> -> vector<16x16xf32>
    %c0_11 = arith.constant 0 : index
    %c0_12 = arith.constant 0 : index
    %15 = vector.load %arg5[%c0_11, %c0_12] : memref<16x1xf32, #tpu.memory_space<vmem>>, vector<16x1xf32>
    %16 = vector.broadcast %15 : vector<16x1xf32> to vector<16x16xf32>
    %17 = arith.addf %14, %16 : vector<16x16xf32>
    %18 = vector.extract_strided_slice %17 {offsets = [0, 0], sizes = [8, 16], strides = [1, 1]} : vector<16x16xf32> to vector<8x16xf32>
    %19 = vector.extract_strided_slice %17 {offsets = [8, 0], sizes = [8, 16], strides = [1, 1]} : vector<16x16xf32> to vector<8x16xf32>
    %20 = arith.negf %19 : vector<8x16xf32>
    %21 = math.exp %20 : vector<8x16xf32>
    %cst_13 = arith.constant 1.000000e+00 : f32
    %22 = vector.broadcast %cst_13 : f32 to vector<8x16xf32>
    %23 = arith.addf %22, %21 : vector<8x16xf32>
    %24 = arith.divf %22, %23 : vector<8x16xf32>
    %25 = arith.mulf %18, %24 : vector<8x16xf32>
    %26 = arith.addf %1, %25 : vector<8x16xf32>
    %c0_14 = arith.constant 0 : index
    %c0_15 = arith.constant 0 : index
    %c0_16 = arith.constant 0 : index
    %27 = vector.load %arg6[%c0_14, %c0_15, %c0_16] : memref<1x8x16xf32, #tpu.memory_space<vmem>>, vector<1x8x16xf32>
    %28 = vector.shape_cast %27 : vector<1x8x16xf32> to vector<8x16xf32>
    %29 = vector.shape_cast %26 : vector<8x16xf32> to vector<1x8x16xf32>
    tpu.vector_store %arg6[%c0_14, %c0_15, %c0_16], %29 {strides = array<i32>} : memref<1x8x16xf32, #tpu.memory_space<vmem>>, vector<1x8x16xf32>,
    return
  }
  func.func @transform_0(%arg0: i32, %arg1: i32) -> (i32, i32, i32) {
    %c0_i32 = arith.constant 0 : i32
    %c0_i32_0 = arith.constant 0 : i32
    return %arg0, %c0_i32, %arg1 : i32, i32, i32
  }
  func.func @transform_1(%arg0: i32, %arg1: i32) -> (i32, i32, i32, i32) {
    %c0_i32 = arith.constant 0 : i32
    %c0_i32_0 = arith.constant 0 : i32
    %c0_i32_1 = arith.constant 0 : i32
    return %arg0, %arg1, %c0_i32, %c0_i32_0 : i32, i32, i32, i32
  }
  func.func @transform_2(%arg0: i32, %arg1: i32) -> (i32, i32) {
    %c0_i32 = arith.constant 0 : i32
    %c0_i32_0 = arith.constant 0 : i32
    %c0_i32_1 = arith.constant 0 : i32
    return %c0_i32, %c0_i32_0 : i32, i32
  }
  func.func @transform_3(%arg0: i32, %arg1: i32) -> (i32, i32) {
    %c0_i32 = arith.constant 0 : i32
    %c0_i32_0 = arith.constant 0 : i32
    %c0_i32_1 = arith.constant 0 : i32
    return %c0_i32, %c0_i32_0 : i32, i32
  }
  func.func @transform_4(%arg0: i32, %arg1: i32) -> (i32, i32, i32) {
    %c0_i32 = arith.constant 0 : i32
    %c0_i32_0 = arith.constant 0 : i32
    return %arg0, %c0_i32, %arg1 : i32, i32, i32
  }
}

</mosaic_0001>

<llo_original>
// kernel: conv1d_glu.1
$region0: #{conv1d_glu.1}
  #allocation0 [shape = 'u32[]', space=smem, size = 0x4, offset = 0x4, fixed_abs, tag = 'smem constant byte address 0x4 - core index']
  #allocation1 [shape = 'u32[144,128]{1,0:T(1,128)}', space=vmem, size = 0x12000, scoped, tag = 'internal scratch']
  %s0 = inlined_call_operand.vmem [shape: f32[2,8,16], index: 0, kind: input, shape index: {}]
  %s1 = inlined_call_operand.vmem [shape: f32[2,1,8,4], index: 1, kind: input, shape index: {}]
  %s2 = inlined_call_operand.vmem [shape: f32[16,40], index: 2, kind: input, shape index: {}]
  %s3 = inlined_call_operand.vmem [shape: f32[16,1], index: 3, kind: input, shape index: {}]
  %s4 = inlined_call_operand.hbm [shape: f32[2,8,16], index: 4, kind: output, shape index: {}]
  %s5 = sld [smem:[#allocation0]]
  $region49: #{conv1d_glu.1} parent=0
    _
  %s7 = ssub.s32 1, %s5
  %s8 = scalar_select 0, %s7, %s5
  $region1: #{conv1d_glu.1} parent=0
    #allocation2 [shape = 'u8[8192]{0}', space=vmem, size = 0x2000, scoped, tag = 'output window, operand 0']
    #allocation3 [shape = 's32[2]{0}', space=sflag, size = 0x8, scoped, tag = 'scoped memory for conv1d_glu.1']
    %9 = vsyncpa [#allocation3], 0
    %s10 = scalar_lea.sflag [#allocation3], 1
    %11 = vsyncpa %s10, 0
    loop: start=0, step=1, limit=4
    $region2: #{conv1d_glu.1} parent=1 // loop_pre_header
      _
    $region3: #{conv1d_glu.1} parent=1 // loop_header
      %s13 = sphi 0, %s17
      %p14 = scmp.ge.s32.totalorder %s13, 4
      %s20 = sphi 0, %s32
      %s21 = sphi 0, %s28
      %s22 = sphi 0, %s20
      %s23 = sphi 0, %s21
      %s24 = sphi 0, %s22
      %s25 = sphi 0, %s23
      %s37 = sphi 0, %s39
      %s40 = sphi 0, %s37
      %s41 = sphi 0, %s40
      %s57 = sphi 0, %s41
      %s65 = sphi 0, %s67
      %s68 = sphi 0, %s65
      %s69 = sphi 0, %s68
      %s85 = sphi 0, %s69
      %s89 = sphi 0, %s89
      %s91 = sphi 0, %s89
      %s92 = sphi 0, %s91
      %s106 = sphi 0, %s92
      %s110 = sphi 0, %s110
      %s112 = sphi 0, %s110
      %s113 = sphi 0, %s112
      %s127 = sphi 0, %s113
      %s135 = sphi 0, %s137
      %s138 = sphi 0, %s135
      %s139 = sphi 0, %s138
      %s155 = sphi 0, %s139
    $region4: #{conv1d_glu.1} parent=1 // loop_header_branch
      %16 = sbr.rel (%p14) target = $region8
    $region5: #{conv1d_glu.1} parent=1 // loop_body
      %s18 = ssub.s32 %s13, 1
      %s19 = ssub.s32 %s13, 2
      %s26 = sadd.s32 1, %s21
      %p27 = scmp.ge.s32.totalorder %s26, 1
      %s28 = scalar_select %p27, 0, %s26
      %s29 = sadd.s32 1, %s20
      %s30 = scalar_select %p27, %s29, %s20
      %p31 = scmp.ge.s32.totalorder %s30, 2
      %s32 = scalar_select %p31, 0, %s30
      %s33 = ssub.s32 %s20, %s32
      %s34 = ssub.s32 %s21, %s28
      %s35 = sor.u32 %s33, %s34
      %p36 = scmp.eq.s32.totalorder %s35, 0
      %s38 = sadd.s32 %s37, 1
      %s39 = scalar_select %p36, %s37, %s38
      %p42 = pneg %p36
      %p43 = scmp.eq.s32.totalorder %s13, 1
      %p44 = por %p42, %p43
      %p45 = scmp.ne.s32.totalorder %s37, %s40
      %p46 = scmp.eq.s32.totalorder %s13, 0
      %p47 = por %p45, %p46
      %p48 = scmp.ne.s32.totalorder %s37, %s40
      %p49 = scmp.eq.s32.totalorder %s18, 1
      %p50 = por %p48, %p49
      %p51 = scmp.ne.s32.totalorder %s40, %s41
      %p52 = scmp.eq.s32.totalorder %s18, 0
      %p53 = por %p51, %p52
      %p54 = scmp.ne.s32.totalorder %s40, %s41
      %p55 = scmp.eq.s32.totalorder %s19, 1
      %p56 = por %p54, %p55
      %p58 = scmp.ne.s32.totalorder %s41, %s57
      %p59 = scmp.eq.s32.totalorder %s19, 0
      %p60 = por %p58, %p59
      %s61 = ssub.s32 %s20, %s32
      %s62 = ssub.s32 %s21, %s28
      %s63 = sor.u32 %s61, %s62
      %p64 = scmp.eq.s32.totalorder %s63, 0
      %s66 = sadd.s32 %s65, 1
      %s67 = scalar_select %p64, %s65, %s66
      %p70 = pneg %p64
      %p71 = scmp.eq.s32.totalorder %s13, 1
      %p72 = por %p70, %p71
      %p73 = scmp.ne.s32.totalorder %s65, %s68
      %p74 = scmp.eq.s32.totalorder %s13, 0
      %p75 = por %p73, %p74
      %p76 = scmp.ne.s32.totalorder %s65, %s68
      %p77 = scmp.eq.s32.totalorder %s18, 1
      %p78 = por %p76, %p77
      %p79 = scmp.ne.s32.totalorder %s68, %s69
      %p80 = scmp.eq.s32.totalorder %s18, 0
      %p81 = por %p79, %p80
      %p82 = scmp.ne.s32.totalorder %s68, %s69
      %p83 = scmp.eq.s32.totalorder %s19, 1
      %p84 = por %p82, %p83
      %p86 = scmp.ne.s32.totalorder %s69, %s85
      %p87 = scmp.eq.s32.totalorder %s19, 0
      %p88 = por %p86, %p87
      %s90 = sadd.s32 %s89, 1
      %p93 = scmp.eq.s32.totalorder %s13, 1
      %p94 = scmp.ne.s32.totalorder %s89, %s91
      %p95 = scmp.eq.s32.totalorder %s13, 0
      %p96 = por %p94, %p95
      %p97 = scmp.ne.s32.totalorder %s89, %s91
      %p98 = scmp.eq.s32.totalorder %s18, 1
      %p99 = por %p97, %p98
      %p100 = scmp.ne.s32.totalorder %s91, %s92
      %p101 = scmp.eq.s32.totalorder %s18, 0
      %p102 = por %p100, %p101
      %p103 = scmp.ne.s32.totalorder %s91, %s92
      %p104 = scmp.eq.s32.totalorder %s19, 1
      %p105 = por %p103, %p104
      %p107 = scmp.ne.s32.totalorder %s92, %s106
      %p108 = scmp.eq.s32.totalorder %s19, 0
      %p109 = por %p107, %p108
      %s111 = sadd.s32 %s110, 1
      %p114 = scmp.eq.s32.totalorder %s13, 1
      %p115 = scmp.ne.s32.totalorder %s110, %s112
      %p116 = scmp.eq.s32.totalorder %s13, 0
      %p117 = por %p115, %p116
      %p118 = scmp.ne.s32.totalorder %s110, %s112
      %p119 = scmp.eq.s32.totalorder %s18, 1
      %p120 = por %p118, %p119
      %p121 = scmp.ne.s32.totalorder %s112, %s113
      %p122 = scmp.eq.s32.totalorder %s18, 0
      %p123 = por %p121, %p122
      %p124 = scmp.ne.s32.totalorder %s112, %s113
      %p125 = scmp.eq.s32.totalorder %s19, 1
      %p126 = por %p124, %p125
      %p128 = scmp.ne.s32.totalorder %s113, %s127
      %p129 = scmp.eq.s32.totalorder %s19, 0
      %p130 = por %p128, %p129
      %s131 = ssub.s32 %s20, %s32
      %s132 = ssub.s32 %s21, %s28
      %s133 = sor.u32 %s131, %s132
      %p134 = scmp.eq.s32.totalorder %s133, 0
      %s136 = sadd.s32 %s135, 1
      %s137 = scalar_select %p134, %s135, %s136
      %p140 = pneg %p134
      %p141 = scmp.eq.s32.totalorder %s13, 1
      %p142 = por %p140, %p141
      %p143 = scmp.ne.s32.totalorder %s135, %s138
      %p144 = scmp.eq.s32.totalorder %s13, 0
      %p145 = por %p143, %p144
      %p146 = scmp.ne.s32.totalorder %s135, %s138
      %p147 = scmp.eq.s32.totalorder %s18, 1
      %p148 = por %p146, %p147
      %p149 = scmp.ne.s32.totalorder %s138, %s139
      %p150 = scmp.eq.s32.totalorder %s18, 0
      %p151 = por %p149, %p150
      %p152 = scmp.ne.s32.totalorder %s138, %s139
      %p153 = scmp.eq.s32.totalorder %s19, 1
      %p154 = por %p152, %p153
      %p156 = scmp.ne.s32.totalorder %s139, %s155
      %p157 = scmp.eq.s32.totalorder %s19, 0
      %p158 = por %p156, %p157
      %p159 = scmp.le.s32.totalorder 1, %s13
      %p160 = scmp.lt.s32.totalorder %s13, 3
      %p161 = pnand %p159, %p160
      %p162 = pneg %p161
      // Predicated region
      $region9: #{conv1d_glu.1} parent=5 // pred_check
        _
      $region10: #{conv1d_glu.1} parent=5 // pred_check_branch
        %164 = sbr.rel (%p161) target = $region12
      $region11: #{conv1d_glu.1} parent=5 // pred_region
        %s165 = ssub.s32 %s13, 1
        // Predicated region
        $region13: #{conv1d_glu.1} parent=11 // pred_check
          %p166 = pneg %p102
        $region14: #{conv1d_glu.1} parent=11 // pred_check_branch
          %168 = sbr.rel (%p166) target = $region16
        $region15: #{conv1d_glu.1} parent=11 // pred_region
          _
        $region16: #{conv1d_glu.1} parent=11 // pred_fallthru
          _
        // Predicated region
        $region17: #{conv1d_glu.1} parent=11 // pred_check
          %p169 = pneg %p123
        $region18: #{conv1d_glu.1} parent=11 // pred_check_branch
          %171 = sbr.rel (%p169) target = $region20
        $region19: #{conv1d_glu.1} parent=11 // pred_region
          _
        $region20: #{conv1d_glu.1} parent=11 // pred_fallthru
          _
      $region12: #{conv1d_glu.1} parent=5 // pred_fallthru
        _
      %p172 = scmp.lt.s32.totalorder %s13, 2
      // Predicated region
      $region21: #{conv1d_glu.1} parent=5 // pred_check
        %p173 = pneg %p172
      $region22: #{conv1d_glu.1} parent=5 // pred_check_branch
        %175 = sbr.rel (%p173) target = $region24
      $region23: #{conv1d_glu.1} parent=5 // pred_region
        // Predicated region
        $region25: #{conv1d_glu.1} parent=23 // pred_check
          %p176 = pneg %p47
        $region26: #{conv1d_glu.1} parent=23 // pred_check_branch
          %178 = sbr.rel (%p176) target = $region28
        $region27: #{conv1d_glu.1} parent=23 // pred_region
          %p179 = scmp.lt.s32.totalorder %s20, 1
          %s180 = scalar_select %p179, %s20, 1
          %p181 = scmp.lt.s32.totalorder %s21, 0
          %s182 = scalar_select %p181, %s21, 0
          %s183 = sadd.s32 %s182, %s180
          %s184 = smul.addr %s183, 8
          %s185 = scalar_lea.vmem %s0, %s184
        $region28: #{conv1d_glu.1} parent=23 // pred_fallthru
          _
        // Predicated region
        $region29: #{conv1d_glu.1} parent=23 // pred_check
          %p186 = pneg %p75
        $region30: #{conv1d_glu.1} parent=23 // pred_check_branch
          %188 = sbr.rel (%p186) target = $region32
        $region31: #{conv1d_glu.1} parent=23 // pred_region
          %p189 = scmp.lt.s32.totalorder %s20, 1
          %s190 = scalar_select %p189, %s20, 1
          %p191 = scmp.lt.s32.totalorder %s21, 0
          %s192 = scalar_select %p191, %s21, 0
          %s193 = sadd.s32 %s192, %s190
          %s194 = smul.addr %s193, 8
          %s195 = scalar_lea.vmem %s1, %s194
        $region32: #{conv1d_glu.1} parent=23 // pred_fallthru
          _
      $region24: #{conv1d_glu.1} parent=5 // pred_fallthru
        _
      %p196 = scmp.le.s32.totalorder 1, %s13
      %p197 = scmp.lt.s32.totalorder %s13, 3
      %p198 = pnand %p196, %p197
      %p199 = pneg %p198
      // Predicated region
      $region33: #{conv1d_glu.1} parent=5 // pred_check
        _
      $region34: #{conv1d_glu.1} parent=5 // pred_check_branch
        %201 = sbr.rel (%p198) target = $region36
      $region35: #{conv1d_glu.1} parent=5 // pred_region
        %s202 = ssub.s32 %s13, 1
        %p203 = scmp.lt.s32.totalorder %s22, 1
        %s204 = scalar_select %p203, %s22, 1
        %p205 = scmp.lt.s32.totalorder %s23, 0
        %s206 = scalar_select %p205, %s23, 0
        %s207 = sadd.s32 %s206, %s204
        %s208 = smul.addr %s207, 8
        %s209 = scalar_lea.vmem %s0, %s208
        %p210 = pneg %p53
        %p211 = pneg %p50
        %p212 = scmp.lt.s32.totalorder %s22, 1
        %s213 = scalar_select %p212, %s22, 1
        %p214 = scmp.lt.s32.totalorder %s23, 0
        %s215 = scalar_select %p214, %s23, 0
        %s216 = sadd.s32 %s215, %s213
        %s217 = smul.addr %s216, 8
        %s218 = scalar_lea.vmem %s1, %s217
        %p219 = pneg %p81
        %p220 = pneg %p78
        %p221 = pneg %p102
        %p222 = pneg %p99
        %p223 = pneg %p123
        %p224 = pneg %p120
        %p225 = pneg %p151
        %p226 = pneg %p148
        %s227 = sand.u32 %s138, 1
        %s228 = scalar_lea.sflag [#allocation3], %s227
        %s229 = sand.u32 %s138, 1
        %s230 = smul.addr %s229, 8
        %s231 = scalar_lea.vmem [#allocation2], %s230
        %p232 = scmp.lt.s32.totalorder %s22, 1
        %s233 = scalar_select %p232, %s22, 1
        %p234 = scmp.lt.s32.totalorder %s23, 0
        %s235 = scalar_select %p234, %s23, 0
        %s236 = sadd.s32 %s235, %s233
        %s237 = smul.addr %s236, 8
        %s238 = scalar_lea.vmem %s0, %s237
        %p239 = scmp.lt.s32.totalorder %s22, 1
        %s240 = scalar_select %p239, %s22, 1
        %p241 = scmp.lt.s32.totalorder %s23, 0
        %s242 = scalar_select %p241, %s23, 0
        %s243 = sadd.s32 %s242, %s240
        %s244 = smul.addr %s243, 8
        %s245 = scalar_lea.vmem %s1, %s244
        %v246 = vld [vmem:[%s238] sm:$0xff]
        %v247 = vld [vmem:[%s245] sm:$0xff]
        %249 = vrot.lane.b32.xlu0 %v246, 2
        %v250 = vpop.permute.xlu0 %249
        %253 = vrot.lane.b32.xlu0 %v247, 16
        %v254 = vpop.permute.xlu0 %253
        %vm256 = vcmask 15360
        %v257 = vsel %vm256, %v247, %v250
        %vm258 = vcmask 146432
        %v259 = vsel %vm258, %v257, %v254
        %261 = vrot.lane.b32.xlu0 %v259, 127
        %v262 = vpop.permute.xlu0 %261
        %264 = vrot.lane.b32.xlu0 %v259, 126
        %v265 = vpop.permute.xlu0 %264
        %267 = vrot.lane.b32.xlu0 %v259, 125
        %v268 = vpop.permute.xlu0 %267
        %270 = vrot.lane.b32.xlu0 %v259, 124
        %v271 = vpop.permute.xlu0 %270
        %v273 = vld [vmem:[%s2] sm:$0xff]
        %v274 = vld [vmem:[%s2 + $0x8] sm:$0xff]
        %v275 = vld [vmem:[%s3] sm:$0xff]
        %v276 = vld [vmem:[%s3 + $0x8] sm:$0xff]
        %278 = vset.pattern.permute.xlu0 0
        %279 = vperm.xlu0 %278, %v275
        %v280 = vpop.permute.xlu0 %279
        %283 = vset.pattern.permute.xlu0 0
        %284 = vperm.xlu0 %283, %v276
        %v285 = vpop.permute.xlu0 %284
        %vm287 = vcmask 326656
        %v289 = vsel %vm287, %v273, 0
        %v292 = vsel %vm287, %v274, 0
        %294 = vmatprep.subr.mxu0 0.0
        %295 = vmatpush1.msra.mxu0 0.0
        %296 = vmatprep.subr.mxu0 0.0
        %297 = vmatpush1.msra.mxu0 0.0
        %298 = vmatprep.subr.mxu0 0.0
        %299 = vmatpush1.msra.mxu0 0.0
        %300 = vmatprep.subr.mxu0 0.0
        %301 = vmatpush1.msra.mxu0 0.0
        %302 = vmatprep.subr.mxu0 0.0
        %303 = vmatpush1.msra.mxu0 0.0
        %304 = vmatprep.subr.mxu0 0.0
        %305 = vmatpush1.msra.mxu0 0.0
        %306 = vmatprep.subr.mxu0 0.0
        %307 = vmatpush1.msra.mxu0 0.0
        %308 = vmatprep.subr.mxu0 0.0
        %309 = vmatpush1.msra.mxu0 0.0
        %310 = vmatprep.subr.mxu0 0.0
        %311 = vmatpush1.msra.mxu0 0.0
        %312 = vmatprep.subr.mxu0 0.0
        %313 = vmatpush1.msra.mxu0 0.0
        %314 = vmatprep.subr.mxu0 0.0
        %315 = vmatpush1.msra.mxu0 0.0
        %316 = vmatprep.subr.mxu0 0.0
        %317 = vmatpush1.msra.mxu0 %v271
        %318 = vmatprep.subr.mxu0 0.0
        %319 = vmatpush1.msra.mxu0 %v268
        %320 = vmatprep.subr.mxu0 0.0
        %321 = vmatpush1.msra.mxu0 %v265
        %322 = vmatprep.subr.mxu0 0.0
        %323 = vmatpush1.msra.mxu0 %v262
        %324 = vmatprep.subr.mxu0 0.0
        %325 = vmatpush1.msra.mxu0 %v259
        %326 = vmatprep.subr.mxu0 0.0
        %327 = vmatpush2.msra.mxu0 0.0
        %328 = vmatprep.subr.mxu0 0.0
        %329 = vmatpush2.msra.mxu0 0.0
        %330 = vmatprep.subr.mxu0 0.0
        %331 = vmatpush2.msra.mxu0 0.0
        %332 = vmatprep.subr.mxu0 0.0
        %333 = vmatpush2.msra.mxu0 0.0
        %334 = vmatprep.subr.mxu0 0.0
        %335 = vmatpush2.msra.mxu0 0.0
        %336 = vmatprep.subr.mxu0 0.0
        %337 = vmatpush2.msra.mxu0 0.0
        %338 = vmatprep.subr.mxu0 0.0
        %339 = vmatpush2.msra.mxu0 0.0
        %340 = vmatprep.subr.mxu0 0.0
        %341 = vmatpush2.msra.mxu0 0.0
        %342 = vmatprep.subr.mxu0 0.0
        %343 = vmatpush2.msra.mxu0 0.0
        %344 = vmatprep.subr.mxu0 0.0
        %345 = vmatpush2.msra.mxu0 0.0
        %346 = vmatprep.subr.mxu0 0.0
        %347 = vmatpush2.msra.mxu0 0.0
        %348 = vmatprep.subr.mxu0 0.0
        %349 = vmatpush2.msra.mxu0 0.0
        %350 = vmatprep.subr.mxu0 0.0
        %351 = vmatpush2.msra.mxu0 0.0
        %352 = vmatprep.subr.mxu0 0.0
        %353 = vmatpush2.msra.mxu0 0.0
        %354 = vmatprep.subr.mxu0 0.0
        %355 = vmatpush2.msra.mxu0 0.0
        %356 = vmatprep.subr.mxu0 0.0
        %357 = vmatpush2.msra.mxu0 0.0
        %358 = vmatprep.mubr.f32.mxu0 0.0
        %359 = vmatmul.mubr.f32.gmra.mxu0 %v289
        %v360 = vpop.f32.mrf.mxu0
        %v361 = vadd.f32 %v280, %v360
        %v362 = vpop.f32.mrf.mxu0
        %363 = vmatprep.mubr.f32.mxu0 0.0
        %364 = vmatmul.mubr.f32.gmra.mxu0 %v292
        %v365 = vpop.f32.mrf.mxu0
        %v366 = vadd.f32 %v285, %v365
        %v367 = vpop.f32.mrf.mxu0
        %368 = vdwg.mxu0
        %v369 = vxor.u32 %v366, 2147483648
        %v370 = vmul.f32 %v369, 1.442695
        %v371 = vpow.pop %v370
        %v372 = vadd.f32 %v371, 1.0
        %v373 = vrcp.pop %v372
        %v374 = vmul.f32 1.0, %v373
        %v375 = vmul.f32 %v361, %v374
        %v376 = vadd.f32 %v246, %v375
        %vm377 = vcmask 130048
        %378 = vst.msk [vmem:[%s231] sm:$0xff] %vm377, %v376
        %s379 = sand.u32 %s138, 1
        %s380 = scalar_lea.sflag [#allocation3], %s379
        %s381 = sand.u32 %s138, 1
        %s382 = smul.addr %s381, 8
        %s383 = scalar_lea.vmem [#allocation2], %s382
        // Predicated region
        $region37: #{conv1d_glu.1} parent=35 // pred_check
          %p384 = pneg %p148
        $region38: #{conv1d_glu.1} parent=35 // pred_check_branch
          %386 = sbr.rel (%p384) target = $region40
        $region39: #{conv1d_glu.1} parent=35 // pred_region
          %s388 = ssub.s32 128, 128
          %389 = vsyncadd %s380, %s388
          %s390 = sadd.s32 %s23, %s22
          %s391 = smul.addr %s390, 128
          %s392 = scalar_lea.hbm %s4, %s391
          %s394 = sshll.u32 %s383, 4
          %s395 = int_to_ptr.vmem [resolvable:$true] %s394
          %397 = dma.vmem_to_hbm [thread:$0]  %s395, 128, %s392, %s380
        $region40: #{conv1d_glu.1} parent=35 // pred_fallthru
          _
      $region36: #{conv1d_glu.1} parent=5 // pred_fallthru
        _
      %p398 = scmp.le.s32.totalorder 2, %s13
      // Predicated region
      $region41: #{conv1d_glu.1} parent=5 // pred_check
        %p399 = pneg %p398
      $region42: #{conv1d_glu.1} parent=5 // pred_check_branch
        %401 = sbr.rel (%p399) target = $region44
      $region43: #{conv1d_glu.1} parent=5 // pred_region
        %s402 = ssub.s32 %s13, 2
        // Predicated region
        $region45: #{conv1d_glu.1} parent=43 // pred_check
          %p403 = pneg %p154
        $region46: #{conv1d_glu.1} parent=43 // pred_check_branch
          %405 = sbr.rel (%p403) target = $region48
        $region47: #{conv1d_glu.1} parent=43 // pred_region
          %s406 = sand.u32 %s139, 1
          %s407 = scalar_lea.sflag [#allocation3], %s406
          %s408 = sand.u32 %s139, 1
          %s409 = smul.addr %s408, 8
          %s410 = scalar_lea.vmem [#allocation2], %s409
          %411 = dma.done %s407, 128
        $region48: #{conv1d_glu.1} parent=43 // pred_fallthru
          _
      $region44: #{conv1d_glu.1} parent=5 // pred_fallthru
        _
    $region6: #{conv1d_glu.1} parent=1 // loop_footer
      %s17 = sadd.s32 1, %s13
    $region7: #{conv1d_glu.1} parent=1 // loop_footer_branch
      %12 = sbr.rel target = $region3
    $region8: #{conv1d_glu.1} parent=1 // loop_exit
      _
    %412 = vsyncpa [#allocation3], 1
    %s413 = scalar_lea.sflag [#allocation3], 1
    %414 = vsyncpa %s413, 1

</llo_original>
